<compile_context>
chip_gen: v5e
topology: v5e:2x2
jax: 0.10.0
libtpu: 0.0.40
codegen_flags: <defaults>
</compile_context>

<pallas_src>
import functools

import jax
import jax.numpy as jnp
from jax.experimental import pallas as pl
from jax.experimental.pallas import tpu as pltpu

_SUBLANE = 8


def _make_rnn_net_kernel(num_layers, batch_padded, seq):
    Bp, S = batch_padded, seq

    def kernel(x_ref, *args):
        # args layout:
        #   per layer l: wih_T[l] (Din_or_H, H), whh_T[l] (H, H), bias[l] (1, H) == bih+bhh
        #   then: wfc_T (H, O), bfc (1, O)
        #   then: out_ref (S*Bp, O)
        #   then scratch: acts_ref (S*Bp, H)
        layer_refs = args[: 3 * num_layers]
        wfc_ref = args[3 * num_layers]
        bfc_ref = args[3 * num_layers + 1]
        out_ref = args[3 * num_layers + 2]
        acts_ref = args[3 * num_layers + 3]

        H = acts_ref.shape[-1]

        # Flat time-major activations: row r = t*Bp + b. Layer 0 reads x directly.
        act = x_ref[...]  # (S*Bp, Din)

        for l in range(num_layers):
            wih_T = layer_refs[3 * l + 0][...]
            whh_T = layer_refs[3 * l + 1][...]
            bias = layer_refs[3 * l + 2][...]

            # Hoisted input projection over ALL timesteps (one batched MXU matmul),
            # staged into the scratch so the serial loop only touches aligned tiles.
            acts_ref[...] = (
                jnp.dot(act, wih_T, preferred_element_type=jnp.float32) + bias
            )  # (S*Bp, H)

            # Serial recurrence. S is small and static -> unrolled Python loop
            # (single kernel invocation, no per-step grid overhead). Each slice is a
            # whole number of sublanes (Bp % 8 == 0): aligned loads / unmasked stores.
            h = jnp.zeros((Bp, H), jnp.float32)  # h0 = zeros, as in the PyTorch forward
            for t in range(S):
                r0 = t * Bp
                h = jnp.tanh(
                    acts_ref[r0:r0 + Bp, :]
                    + jnp.dot(h, whh_T, preferred_element_type=jnp.float32)
                )
                acts_ref[r0:r0 + Bp, :] = h  # overwrite pre[t] with h[t] in place

            act = acts_ref[...]  # (S*Bp, H) -> input to next layer / to the FC head

        # Final Linear + sigmoid over all timesteps; single whole-slab store.
        logits = jnp.dot(act, wfc_ref[...], preferred_element_type=jnp.float32) + bfc_ref[...]
        out_ref[...] = jax.nn.sigmoid(logits).astype(out_ref.dtype)

    return kernel


def rnn_net_forward(x, params, *, num_layers, hidden_size, num_objects):
    """x: (batch, seq, input_size) float32. Returns (batch, seq, num_objects) float32."""
    B, S, Din = x.shape
    H, O = hidden_size, num_objects
    Bp = ((B + _SUBLANE - 1) // _SUBLANE) * _SUBLANE  # pad batch to a sublane multiple

    # Flat time-major input slab: row r = t*Bp + b (tiny host-side layout op).
    xt = jnp.transpose(x, (1, 0, 2))  # (S, B, Din)
    if Bp != B:
        xt = jnp.pad(xt, ((0, 0), (0, Bp - B), (0, 0)))
    x_flat = xt.reshape(S * Bp, Din)

    flat_inputs = [x_flat]
    for l in range(num_layers):
        flat_inputs.append(params[f"wih_{l}"].T)                                      # (Din or H, H)
        flat_inputs.append(params[f"whh_{l}"].T)                                      # (H, H)
        flat_inputs.append((params[f"bih_{l}"] + params[f"bhh_{l}"]).reshape(1, H))   # fused bias
    flat_inputs.append(params["wfc"].T)                                               # (H, O)
    flat_inputs.append(params["bfc"].reshape(1, O))                                   # (1, O)

    kernel = _make_rnn_net_kernel(num_layers, Bp, S)

    # No grid: single invocation, all (tiny) operands VMEM-resident, weights loaded once.
    out_flat = pl.pallas_call(
        kernel,
        out_shape=jax.ShapeDtypeStruct((S * Bp, O), jnp.float32),
        scratch_shapes=[pltpu.VMEM((S * Bp, H), jnp.float32)],
    )(*flat_inputs)

    # Undo the flat time-major layout and drop batch padding: (S*Bp, O) -> (B, S, O).
    out = out_flat.reshape(S, Bp, O)[:, :B, :]
    return jnp.transpose(out, (1, 0, 2))


def init_params(key, input_size, hidden_size, num_layers, num_objects):
    """Deterministic init mimicking PyTorch's uniform(-1/sqrt(H), 1/sqrt(H))."""
    params = {}
    bound = 1.0 / jnp.sqrt(jnp.float32(hidden_size))
    for l in range(num_layers):
        in_dim = input_size if l == 0 else hidden_size
        key, k1, k2, k3, k4 = jax.random.split(key, 5)
        params[f"wih_{l}"] = jax.random.uniform(k1, (hidden_size, in_dim), jnp.float32, -bound, bound)
        params[f"whh_{l}"] = jax.random.uniform(k2, (hidden_size, hidden_size), jnp.float32, -bound, bound)
        params[f"bih_{l}"] = jax.random.uniform(k3, (hidden_size,), jnp.float32, -bound, bound)
        params[f"bhh_{l}"] = jax.random.uniform(k4, (hidden_size,), jnp.float32, -bound, bound)
    key, k1, k2 = jax.random.split(key, 3)
    fc_bound = 1.0 / jnp.sqrt(jnp.float32(hidden_size))
    params["wfc"] = jax.random.uniform(k1, (num_objects, hidden_size), jnp.float32, -fc_bound, fc_bound)
    params["bfc"] = jax.random.uniform(k2, (num_objects,), jnp.float32, -fc_bound, fc_bound)
    return params


def rnn_net_reference(x, params, *, num_layers, hidden_size, num_objects):
    """Pure-JAX reference of RNN_Net.forward for validation."""
    B, S, _ = x.shape
    layer_in = x
    for l in range(num_layers):
        wih, whh = params[f"wih_{l}"], params[f"whh_{l}"]
        bih, bhh = params[f"bih_{l}"], params[f"bhh_{l}"]

        def step(h, xt):
            h_new = jnp.tanh(xt @ wih.T + bih + h @ whh.T + bhh)
            return h_new, h_new

        h0 = jnp.zeros((B, hidden_size), jnp.float32)
        _, outs = jax.lax.scan(step, h0, jnp.transpose(layer_in, (1, 0, 2)))
        layer_in = jnp.transpose(outs, (1, 0, 2))
    logits = layer_in @ params["wfc"].T + params["bfc"]
    return jax.nn.sigmoid(logits)


if __name__ == "__main__":
    # Small shapes consistent with the module's forward.
    batch, seq, input_size = 2, 8, 16
    hidden_size, num_layers, num_objects = 32, 2, 4

    key = jax.random.PRNGKey(0)
    key, kx = jax.random.split(key)
    x = jax.random.normal(kx, (batch, seq, input_size), jnp.float32)
    params = init_params(key, input_size, hidden_size, num_layers, num_objects)

    fwd = functools.partial(
        rnn_net_forward,
        num_layers=num_layers,
        hidden_size=hidden_size,
        num_objects=num_objects,
    )
    out = jax.block_until_ready(fwd(x, params))

    ref = rnn_net_reference(
        x, params, num_layers=num_layers, hidden_size=hidden_size, num_objects=num_objects
    )
    assert out.shape == (batch, seq, num_objects)
    assert jnp.allclose(out, ref, atol=1e-5, rtol=1e-5), "mismatch vs pure-JAX reference"

    print("KERNEL_OK")
</pallas_src>

<mosaic_0001>
module attributes {stable_mosaic.version = 11 : i64} {
  func.func @kernel(%arg0: memref<64x16xf32, #tpu.memory_space<vmem>>, %arg1: memref<16x32xf32, #tpu.memory_space<vmem>>, %arg2: memref<32x32xf32, #tpu.memory_space<vmem>>, %arg3: memref<1x32xf32, #tpu.memory_space<vmem>>, %arg4: memref<32x32xf32, #tpu.memory_space<vmem>>, %arg5: memref<32x32xf32, #tpu.memory_space<vmem>>, %arg6: memref<1x32xf32, #tpu.memory_space<vmem>>, %arg7: memref<32x4xf32, #tpu.memory_space<vmem>>, %arg8: memref<1x4xf32, #tpu.memory_space<vmem>>, %arg9: memref<64x4xf32, #tpu.memory_space<vmem>>, %arg10: memref<64x32xf32, #tpu.memory_space<vmem>>) attributes {dimension_semantics = [], scalar_prefetch = 0 : i64, scratch_operands = 1 : i64, tpu.core_type = #tpu.core_type<tc>} {
    %c0 = arith.constant 0 : index
    %c0_0 = arith.constant 0 : index
    %0 = vector.load %arg0[%c0, %c0_0] : memref<64x16xf32, #tpu.memory_space<vmem>>, vector<64x16xf32>
    %c0_1 = arith.constant 0 : index
    %c0_2 = arith.constant 0 : index
    %1 = vector.load %arg1[%c0_1, %c0_2] : memref<16x32xf32, #tpu.memory_space<vmem>>, vector<16x32xf32>
    %c0_3 = arith.constant 0 : index
    %c0_4 = arith.constant 0 : index
    %2 = vector.load %arg2[%c0_3, %c0_4] : memref<32x32xf32, #tpu.memory_space<vmem>>, vector<32x32xf32>
    %c0_5 = arith.constant 0 : index
    %c0_6 = arith.constant 0 : index
    %3 = vector.load %arg3[%c0_5, %c0_6] : memref<1x32xf32, #tpu.memory_space<vmem>>, vector<1x32xf32>
    %cst = arith.constant dense<0.000000e+00> : vector<64x32xf32>
    %4 = tpu.matmul %0, %1, %cst {dimension_numbers = #tpu.dot_dimension_numbers<[1], [0], [0], [1], [0, 0, 1, 1], [], []>} : vector<64x16xf32>, vector<16x32xf32>, vector<64x32xf32> -> vector<64x32xf32>
    %5 = vector.broadcast %3 : vector<1x32xf32> to vector<64x32xf32>
    %6 = arith.addf %4, %5 : vector<64x32xf32>
    %c0_7 = arith.constant 0 : index
    %c0_8 = arith.constant 0 : index
    %7 = vector.load %arg10[%c0_7, %c0_8] : memref<64x32xf32, #tpu.memory_space<vmem>>, vector<64x32xf32>
    tpu.vector_store %arg10[%c0_7, %c0_8], %6 {strides = array<i32>} : memref<64x32xf32, #tpu.memory_space<vmem>>, vector<64x32xf32>,
    %cst_9 = arith.constant 0.000000e+00 : f32
    %8 = vector.broadcast %cst_9 : f32 to vector<8x32xf32>
    %c0_10 = arith.constant 0 : index
    %c0_11 = arith.constant 0 : index
    %9 = vector.load %arg10[%c0_10, %c0_11] : memref<64x32xf32, #tpu.memory_space<vmem>>, vector<8x32xf32>
    %cst_12 = arith.constant dense<0.000000e+00> : vector<8x32xf32>
    %10 = tpu.matmul %8, %2, %cst_12 {dimension_numbers = #tpu.dot_dimension_numbers<[1], [0], [0], [1], [0, 0, 1, 1], [], []>} : vector<8x32xf32>, vector<32x32xf32>, vector<8x32xf32> -> vector<8x32xf32>
    %11 = arith.addf %9, %10 : vector<8x32xf32>
    %12 = math.tanh %11 : vector<8x32xf32>
    %c0_13 = arith.constant 0 : index
    %c0_14 = arith.constant 0 : index
    %13 = vector.load %arg10[%c0_13, %c0_14] : memref<64x32xf32, #tpu.memory_space<vmem>>, vector<8x32xf32>
    tpu.vector_store %arg10[%c0_13, %c0_14], %12 {strides = array<i32>} : memref<64x32xf32, #tpu.memory_space<vmem>>, vector<8x32xf32>,
    %c8 = arith.constant 8 : index
    %c0_15 = arith.constant 0 : index
    %14 = vector.load %arg10[%c8, %c0_15] : memref<64x32xf32, #tpu.memory_space<vmem>>, vector<8x32xf32>
    %cst_16 = arith.constant dense<0.000000e+00> : vector<8x32xf32>
    %15 = tpu.matmul %12, %2, %cst_16 {dimension_numbers = #tpu.dot_dimension_numbers<[1], [0], [0], [1], [0, 0, 1, 1], [], []>} : vector<8x32xf32>, vector<32x32xf32>, vector<8x32xf32> -> vector<8x32xf32>
    %16 = arith.addf %14, %15 : vector<8x32xf32>
    %17 = math.tanh %16 : vector<8x32xf32>
    %c8_17 = arith.constant 8 : index
    %c0_18 = arith.constant 0 : index
    %18 = vector.load %arg10[%c8_17, %c0_18] : memref<64x32xf32, #tpu.memory_space<vmem>>, vector<8x32xf32>
    tpu.vector_store %arg10[%c8_17, %c0_18], %17 {strides = array<i32>} : memref<64x32xf32, #tpu.memory_space<vmem>>, vector<8x32xf32>,
    %c16 = arith.constant 16 : index
    %c0_19 = arith.constant 0 : index
    %19 = vector.load %arg10[%c16, %c0_19] : memref<64x32xf32, #tpu.memory_space<vmem>>, vector<8x32xf32>
    %cst_20 = arith.constant dense<0.000000e+00> : vector<8x32xf32>
    %20 = tpu.matmul %17, %2, %cst_20 {dimension_numbers = #tpu.dot_dimension_numbers<[1], [0], [0], [1], [0, 0, 1, 1], [], []>} : vector<8x32xf32>, vector<32x32xf32>, vector<8x32xf32> -> vector<8x32xf32>
    %21 = arith.addf %19, %20 : vector<8x32xf32>
    %22 = math.tanh %21 : vector<8x32xf32>
    %c16_21 = arith.constant 16 : index
    %c0_22 = arith.constant 0 : index
    %23 = vector.load %arg10[%c16_21, %c0_22] : memref<64x32xf32, #tpu.memory_space<vmem>>, vector<8x32xf32>
    tpu.vector_store %arg10[%c16_21, %c0_22], %22 {strides = array<i32>} : memref<64x32xf32, #tpu.memory_space<vmem>>, vector<8x32xf32>,
    %c24 = arith.constant 24 : index
    %c0_23 = arith.constant 0 : index
    %24 = vector.load %arg10[%c24, %c0_23] : memref<64x32xf32, #tpu.memory_space<vmem>>, vector<8x32xf32>
    %cst_24 = arith.constant dense<0.000000e+00> : vector<8x32xf32>
    %25 = tpu.matmul %22, %2, %cst_24 {dimension_numbers = #tpu.dot_dimension_numbers<[1], [0], [0], [1], [0, 0, 1, 1], [], []>} : vector<8x32xf32>, vector<32x32xf32>, vector<8x32xf32> -> vector<8x32xf32>
    %26 = arith.addf %24, %25 : vector<8x32xf32>
    %27 = math.tanh %26 : vector<8x32xf32>
    %c24_25 = arith.constant 24 : index
    %c0_26 = arith.constant 0 : index
    %28 = vector.load %arg10[%c24_25, %c0_26] : memref<64x32xf32, #tpu.memory_space<vmem>>, vector<8x32xf32>
    tpu.vector_store %arg10[%c24_25, %c0_26], %27 {strides = array<i32>} : memref<64x32xf32, #tpu.memory_space<vmem>>, vector<8x32xf32>,
    %c32 = arith.constant 32 : index
    %c0_27 = arith.constant 0 : index
    %29 = vector.load %arg10[%c32, %c0_27] : memref<64x32xf32, #tpu.memory_space<vmem>>, vector<8x32xf32>
    %cst_28 = arith.constant dense<0.000000e+00> : vector<8x32xf32>
    %30 = tpu.matmul %27, %2, %cst_28 {dimension_numbers = #tpu.dot_dimension_numbers<[1], [0], [0], [1], [0, 0, 1, 1], [], []>} : vector<8x32xf32>, vector<32x32xf32>, vector<8x32xf32> -> vector<8x32xf32>
    %31 = arith.addf %29, %30 : vector<8x32xf32>
    %32 = math.tanh %31 : vector<8x32xf32>
    %c32_29 = arith.constant 32 : index
    %c0_30 = arith.constant 0 : index
    %33 = vector.load %arg10[%c32_29, %c0_30] : memref<64x32xf32, #tpu.memory_space<vmem>>, vector<8x32xf32>
    tpu.vector_store %arg10[%c32_29, %c0_30], %32 {strides = array<i32>} : memref<64x32xf32, #tpu.memory_space<vmem>>, vector<8x32xf32>,
    %c40 = arith.constant 40 : index
    %c0_31 = arith.constant 0 : index
    %34 = vector.load %arg10[%c40, %c0_31] : memref<64x32xf32, #tpu.memory_space<vmem>>, vector<8x32xf32>
    %cst_32 = arith.constant dense<0.000000e+00> : vector<8x32xf32>
    %35 = tpu.matmul %32, %2, %cst_32 {dimension_numbers = #tpu.dot_dimension_numbers<[1], [0], [0], [1], [0, 0, 1, 1], [], []>} : vector<8x32xf32>, vector<32x32xf32>, vector<8x32xf32> -> vector<8x32xf32>
    %36 = arith.addf %34, %35 : vector<8x32xf32>
    %37 = math.tanh %36 : vector<8x32xf32>
    %c40_33 = arith.constant 40 : index
    %c0_34 = arith.constant 0 : index
    %38 = vector.load %arg10[%c40_33, %c0_34] : memref<64x32xf32, #tpu.memory_space<vmem>>, vector<8x32xf32>
    tpu.vector_store %arg10[%c40_33, %c0_34], %37 {strides = array<i32>} : memref<64x32xf32, #tpu.memory_space<vmem>>, vector<8x32xf32>,
    %c48 = arith.constant 48 : index
    %c0_35 = arith.constant 0 : index
    %39 = vector.load %arg10[%c48, %c0_35] : memref<64x32xf32, #tpu.memory_space<vmem>>, vector<8x32xf32>
    %cst_36 = arith.constant dense<0.000000e+00> : vector<8x32xf32>
    %40 = tpu.matmul %37, %2, %cst_36 {dimension_numbers = #tpu.dot_dimension_numbers<[1], [0], [0], [1], [0, 0, 1, 1], [], []>} : vector<8x32xf32>, vector<32x32xf32>, vector<8x32xf32> -> vector<8x32xf32>
    %41 = arith.addf %39, %40 : vector<8x32xf32>
    %42 = math.tanh %41 : vector<8x32xf32>
    %c48_37 = arith.constant 48 : index
    %c0_38 = arith.constant 0 : index
    %43 = vector.load %arg10[%c48_37, %c0_38] : memref<64x32xf32, #tpu.memory_space<vmem>>, vector<8x32xf32>
    tpu.vector_store %arg10[%c48_37, %c0_38], %42 {strides = array<i32>} : memref<64x32xf32, #tpu.memory_space<vmem>>, vector<8x32xf32>,
    %c56 = arith.constant 56 : index
    %c0_39 = arith.constant 0 : index
    %44 = vector.load %arg10[%c56, %c0_39] : memref<64x32xf32, #tpu.memory_space<vmem>>, vector<8x32xf32>
    %cst_40 = arith.constant dense<0.000000e+00> : vector<8x32xf32>
    %45 = tpu.matmul %42, %2, %cst_40 {dimension_numbers = #tpu.dot_dimension_numbers<[1], [0], [0], [1], [0, 0, 1, 1], [], []>} : vector<8x32xf32>, vector<32x32xf32>, vector<8x32xf32> -> vector<8x32xf32>
    %46 = arith.addf %44, %45 : vector<8x32xf32>
    %47 = math.tanh %46 : vector<8x32xf32>
    %c56_41 = arith.constant 56 : index
    %c0_42 = arith.constant 0 : index
    %48 = vector.load %arg10[%c56_41, %c0_42] : memref<64x32xf32, #tpu.memory_space<vmem>>, vector<8x32xf32>
    tpu.vector_store %arg10[%c56_41, %c0_42], %47 {strides = array<i32>} : memref<64x32xf32, #tpu.memory_space<vmem>>, vector<8x32xf32>,
    %c0_43 = arith.constant 0 : index
    %c0_44 = arith.constant 0 : index
    %49 = vector.load %arg10[%c0_43, %c0_44] : memref<64x32xf32, #tpu.memory_space<vmem>>, vector<64x32xf32>
    %c0_45 = arith.constant 0 : index
    %c0_46 = arith.constant 0 : index
    %50 = vector.load %arg4[%c0_45, %c0_46] : memref<32x32xf32, #tpu.memory_space<vmem>>, vector<32x32xf32>
    %c0_47 = arith.constant 0 : index
    %c0_48 = arith.constant 0 : index
    %51 = vector.load %arg5[%c0_47, %c0_48] : memref<32x32xf32, #tpu.memory_space<vmem>>, vector<32x32xf32>
    %c0_49 = arith.constant 0 : index
    %c0_50 = arith.constant 0 : index
    %52 = vector.load %arg6[%c0_49, %c0_50] : memref<1x32xf32, #tpu.memory_space<vmem>>, vector<1x32xf32>
    %cst_51 = arith.constant dense<0.000000e+00> : vector<64x32xf32>
    %53 = tpu.matmul %49, %50, %cst_51 {dimension_numbers = #tpu.dot_dimension_numbers<[1], [0], [0], [1], [0, 0, 1, 1], [], []>} : vector<64x32xf32>, vector<32x32xf32>, vector<64x32xf32> -> vector<64x32xf32>
    %54 = vector.broadcast %52 : vector<1x32xf32> to vector<64x32xf32>
    %55 = arith.addf %53, %54 : vector<64x32xf32>
    %c0_52 = arith.constant 0 : index
    %c0_53 = arith.constant 0 : index
    %56 = vector.load %arg10[%c0_52, %c0_53] : memref<64x32xf32, #tpu.memory_space<vmem>>, vector<64x32xf32>
    tpu.vector_store %arg10[%c0_52, %c0_53], %55 {strides = array<i32>} : memref<64x32xf32, #tpu.memory_space<vmem>>, vector<64x32xf32>,
    %cst_54 = arith.constant 0.000000e+00 : f32
    %57 = vector.broadcast %cst_54 : f32 to vector<8x32xf32>
    %c0_55 = arith.constant 0 : index
    %c0_56 = arith.constant 0 : index
    %58 = vector.load %arg10[%c0_55, %c0_56] : memref<64x32xf32, #tpu.memory_space<vmem>>, vector<8x32xf32>
    %cst_57 = arith.constant dense<0.000000e+00> : vector<8x32xf32>
    %59 = tpu.matmul %57, %51, %cst_57 {dimension_numbers = #tpu.dot_dimension_numbers<[1], [0], [0], [1], [0, 0, 1, 1], [], []>} : vector<8x32xf32>, vector<32x32xf32>, vector<8x32xf32> -> vector<8x32xf32>
    %60 = arith.addf %58, %59 : vector<8x32xf32>
    %61 = math.tanh %60 : vector<8x32xf32>
    %c0_58 = arith.constant 0 : index
    %c0_59 = arith.constant 0 : index
    %62 = vector.load %arg10[%c0_58, %c0_59] : memref<64x32xf32, #tpu.memory_space<vmem>>, vector<8x32xf32>
    tpu.vector_store %arg10[%c0_58, %c0_59], %61 {strides = array<i32>} : memref<64x32xf32, #tpu.memory_space<vmem>>, vector<8x32xf32>,
    %c8_60 = arith.constant 8 : index
    %c0_61 = arith.constant 0 : index
    %63 = vector.load %arg10[%c8_60, %c0_61] : memref<64x32xf32, #tpu.memory_space<vmem>>, vector<8x32xf32>
    %cst_62 = arith.constant dense<0.000000e+00> : vector<8x32xf32>
    %64 = tpu.matmul %61, %51, %cst_62 {dimension_numbers = #tpu.dot_dimension_numbers<[1], [0], [0], [1], [0, 0, 1, 1], [], []>} : vector<8x32xf32>, vector<32x32xf32>, vector<8x32xf32> -> vector<8x32xf32>
    %65 = arith.addf %63, %64 : vector<8x32xf32>
    %66 = math.tanh %65 : vector<8x32xf32>
    %c8_63 = arith.constant 8 : index
    %c0_64 = arith.constant 0 : index
    %67 = vector.load %arg10[%c8_63, %c0_64] : memref<64x32xf32, #tpu.memory_space<vmem>>, vector<8x32xf32>
    tpu.vector_store %arg10[%c8_63, %c0_64], %66 {strides = array<i32>} : memref<64x32xf32, #tpu.memory_space<vmem>>, vector<8x32xf32>,
    %c16_65 = arith.constant 16 : index
    %c0_66 = arith.constant 0 : index
    %68 = vector.load %arg10[%c16_65, %c0_66] : memref<64x32xf32, #tpu.memory_space<vmem>>, vector<8x32xf32>
    %cst_67 = arith.constant dense<0.000000e+00> : vector<8x32xf32>
    %69 = tpu.matmul %66, %51, %cst_67 {dimension_numbers = #tpu.dot_dimension_numbers<[1], [0], [0], [1], [0, 0, 1, 1], [], []>} : vector<8x32xf32>, vector<32x32xf32>, vector<8x32xf32> -> vector<8x32xf32>
    %70 = arith.addf %68, %69 : vector<8x32xf32>
    %71 = math.tanh %70 : vector<8x32xf32>
    %c16_68 = arith.constant 16 : index
    %c0_69 = arith.constant 0 : index
    %72 = vector.load %arg10[%c16_68, %c0_69] : memref<64x32xf32, #tpu.memory_space<vmem>>, vector<8x32xf32>
    tpu.vector_store %arg10[%c16_68, %c0_69], %71 {strides = array<i32>} : memref<64x32xf32, #tpu.memory_space<vmem>>, vector<8x32xf32>,
    %c24_70 = arith.constant 24 : index
    %c0_71 = arith.constant 0 : index
    %73 = vector.load %arg10[%c24_70, %c0_71] : memref<64x32xf32, #tpu.memory_space<vmem>>, vector<8x32xf32>
    %cst_72 = arith.constant dense<0.000000e+00> : vector<8x32xf32>
    %74 = tpu.matmul %71, %51, %cst_72 {dimension_numbers = #tpu.dot_dimension_numbers<[1], [0], [0], [1], [0, 0, 1, 1], [], []>} : vector<8x32xf32>, vector<32x32xf32>, vector<8x32xf32> -> vector<8x32xf32>
    %75 = arith.addf %73, %74 : vector<8x32xf32>
    %76 = math.tanh %75 : vector<8x32xf32>
    %c24_73 = arith.constant 24 : index
    %c0_74 = arith.constant 0 : index
    %77 = vector.load %arg10[%c24_73, %c0_74] : memref<64x32xf32, #tpu.memory_space<vmem>>, vector<8x32xf32>
    tpu.vector_store %arg10[%c24_73, %c0_74], %76 {strides = array<i32>} : memref<64x32xf32, #tpu.memory_space<vmem>>, vector<8x32xf32>,
    %c32_75 = arith.constant 32 : index
    %c0_76 = arith.constant 0 : index
    %78 = vector.load %arg10[%c32_75, %c0_76] : memref<64x32xf32, #tpu.memory_space<vmem>>, vector<8x32xf32>
    %cst_77 = arith.constant dense<0.000000e+00> : vector<8x32xf32>
    %79 = tpu.matmul %76, %51, %cst_77 {dimension_numbers = #tpu.dot_dimension_numbers<[1], [0], [0], [1], [0, 0, 1, 1], [], []>} : vector<8x32xf32>, vector<32x32xf32>, vector<8x32xf32> -> vector<8x32xf32>
    %80 = arith.addf %78, %79 : vector<8x32xf32>
    %81 = math.tanh %80 : vector<8x32xf32>
    %c32_78 = arith.constant 32 : index
    %c0_79 = arith.constant 0 : index
    %82 = vector.load %arg10[%c32_78, %c0_79] : memref<64x32xf32, #tpu.memory_space<vmem>>, vector<8x32xf32>
    tpu.vector_store %arg10[%c32_78, %c0_79], %81 {strides = array<i32>} : memref<64x32xf32, #tpu.memory_space<vmem>>, vector<8x32xf32>,
    %c40_80 = arith.constant 40 : index
    %c0_81 = arith.constant 0 : index
    %83 = vector.load %arg10[%c40_80, %c0_81] : memref<64x32xf32, #tpu.memory_space<vmem>>, vector<8x32xf32>
    %cst_82 = arith.constant dense<0.000000e+00> : vector<8x32xf32>
    %84 = tpu.matmul %81, %51, %cst_82 {dimension_numbers = #tpu.dot_dimension_numbers<[1], [0], [0], [1], [0, 0, 1, 1], [], []>} : vector<8x32xf32>, vector<32x32xf32>, vector<8x32xf32> -> vector<8x32xf32>
    %85 = arith.addf %83, %84 : vector<8x32xf32>
    %86 = math.tanh %85 : vector<8x32xf32>
    %c40_83 = arith.constant 40 : index
    %c0_84 = arith.constant 0 : index
    %87 = vector.load %arg10[%c40_83, %c0_84] : memref<64x32xf32, #tpu.memory_space<vmem>>, vector<8x32xf32>
    tpu.vector_store %arg10[%c40_83, %c0_84], %86 {strides = array<i32>} : memref<64x32xf32, #tpu.memory_space<vmem>>, vector<8x32xf32>,
    %c48_85 = arith.constant 48 : index
    %c0_86 = arith.constant 0 : index
    %88 = vector.load %arg10[%c48_85, %c0_86] : memref<64x32xf32, #tpu.memory_space<vmem>>, vector<8x32xf32>
    %cst_87 = arith.constant dense<0.000000e+00> : vector<8x32xf32>
    %89 = tpu.matmul %86, %51, %cst_87 {dimension_numbers = #tpu.dot_dimension_numbers<[1], [0], [0], [1], [0, 0, 1, 1], [], []>} : vector<8x32xf32>, vector<32x32xf32>, vector<8x32xf32> -> vector<8x32xf32>
    %90 = arith.addf %88, %89 : vector<8x32xf32>
    %91 = math.tanh %90 : vector<8x32xf32>
    %c48_88 = arith.constant 48 : index
    %c0_89 = arith.constant 0 : index
    %92 = vector.load %arg10[%c48_88, %c0_89] : memref<64x32xf32, #tpu.memory_space<vmem>>, vector<8x32xf32>
    tpu.vector_store %arg10[%c48_88, %c0_89], %91 {strides = array<i32>} : memref<64x32xf32, #tpu.memory_space<vmem>>, vector<8x32xf32>,
    %c56_90 = arith.constant 56 : index
    %c0_91 = arith.constant 0 : index
    %93 = vector.load %arg10[%c56_90, %c0_91] : memref<64x32xf32, #tpu.memory_space<vmem>>, vector<8x32xf32>
    %cst_92 = arith.constant dense<0.000000e+00> : vector<8x32xf32>
    %94 = tpu.matmul %91, %51, %cst_92 {dimension_numbers = #tpu.dot_dimension_numbers<[1], [0], [0], [1], [0, 0, 1, 1], [], []>} : vector<8x32xf32>, vector<32x32xf32>, vector<8x32xf32> -> vector<8x32xf32>
    %95 = arith.addf %93, %94 : vector<8x32xf32>
    %96 = math.tanh %95 : vector<8x32xf32>
    %c56_93 = arith.constant 56 : index
    %c0_94 = arith.constant 0 : index
    %97 = vector.load %arg10[%c56_93, %c0_94] : memref<64x32xf32, #tpu.memory_space<vmem>>, vector<8x32xf32>
    tpu.vector_store %arg10[%c56_93, %c0_94], %96 {strides = array<i32>} : memref<64x32xf32, #tpu.memory_space<vmem>>, vector<8x32xf32>,
    %c0_95 = arith.constant 0 : index
    %c0_96 = arith.constant 0 : index
    %98 = vector.load %arg10[%c0_95, %c0_96] : memref<64x32xf32, #tpu.memory_space<vmem>>, vector<64x32xf32>
    %c0_97 = arith.constant 0 : index
    %c0_98 = arith.constant 0 : index
    %99 = vector.load %arg7[%c0_97, %c0_98] : memref<32x4xf32, #tpu.memory_space<vmem>>, vector<32x4xf32>
    %cst_99 = arith.constant dense<0.000000e+00> : vector<64x4xf32>
    %100 = tpu.matmul %98, %99, %cst_99 {dimension_numbers = #tpu.dot_dimension_numbers<[1], [0], [0], [1], [0, 0, 1, 1], [], []>} : vector<64x32xf32>, vector<32x4xf32>, vector<64x4xf32> -> vector<64x4xf32>
    %c0_100 = arith.constant 0 : index
    %c0_101 = arith.constant 0 : index
    %101 = vector.load %arg8[%c0_100, %c0_101] : memref<1x4xf32, #tpu.memory_space<vmem>>, vector<1x4xf32>
    %102 = vector.broadcast %101 : vector<1x4xf32> to vector<64x4xf32>
    %103 = arith.addf %100, %102 : vector<64x4xf32>
    %104 = arith.negf %103 : vector<64x4xf32>
    %105 = math.exp %104 : vector<64x4xf32>
    %cst_102 = arith.constant 1.000000e+00 : f32
    %106 = vector.broadcast %cst_102 : f32 to vector<64x4xf32>
    %107 = arith.addf %106, %105 : vector<64x4xf32>
    %108 = arith.divf %106, %107 : vector<64x4xf32>
    %c0_103 = arith.constant 0 : index
    %c0_104 = arith.constant 0 : index
    %109 = vector.load %arg9[%c0_103, %c0_104] : memref<64x4xf32, #tpu.memory_space<vmem>>, vector<64x4xf32>
    tpu.vector_store %arg9[%c0_103, %c0_104], %108 {strides = array<i32>} : memref<64x4xf32, #tpu.memory_space<vmem>>, vector<64x4xf32>,
    return
  }
}

</mosaic_0001>

<llo_original>
// kernel: tpu_custom_call.1
$region0: #{tpu_custom_call.1}
  #allocation0 [shape = 'u32[]', space=smem, size = 0x4, offset = 0x4, fixed_abs, tag = 'smem constant byte address 0x4 - core index']
  #allocation1 [shape = 'u32[72,128]{1,0:T(1,128)}', space=vmem, size = 0x9000, scoped, tag = 'internal scratch']
  #allocation2 [shape = 'f32[64,32]{1,0:T(8,128)}', space=vmem, size = 0x8000, scoped, tag = 'scratch operand']
  %s0 = inlined_call_operand.vmem [shape: f32[64,16], index: 0, kind: input, shape index: {}]
  %s1 = inlined_call_operand.hbm [shape: f32[16,32], index: 1, kind: input, shape index: {}]
  %s2 = inlined_call_operand.vmem [shape: f32[32,32], index: 2, kind: input, shape index: {}]
  %s3 = inlined_call_operand.vmem [shape: f32[1,32], index: 3, kind: input, shape index: {}]
  %s4 = inlined_call_operand.vmem [shape: f32[32,32], index: 4, kind: input, shape index: {}]
  %s5 = inlined_call_operand.vmem [shape: f32[32,32], index: 5, kind: input, shape index: {}]
  %s6 = inlined_call_operand.vmem [shape: f32[1,32], index: 6, kind: input, shape index: {}]
  %s7 = inlined_call_operand.vmem [shape: f32[32,4], index: 7, kind: input, shape index: {}]
  %s8 = inlined_call_operand.vmem [shape: f32[1,4], index: 8, kind: input, shape index: {}]
  %s9 = inlined_call_operand.vmem [shape: f32[64,4], index: 9, kind: output, shape index: {}]
  %s10 = sld [smem:[#allocation0]]
  $region50: #{tpu_custom_call.1} parent=0
    _
  %s12 = ssub.s32 1, %s10
  %s13 = scalar_select 0, %s12, %s10
  $region1: #{tpu_custom_call.1} parent=0
    #allocation3 [shape = 'u8[8192]{0}', space=vmem, size = 0x2000, scoped, tag = 'input window, operand 1, single buffered']
    #allocation4 [shape = 's32[1]{0}', space=sflag, size = 0x4, scoped, tag = 'scoped memory for tpu_custom_call.1']
    %14 = vsyncpa [#allocation4], 0
    // Predicated region
    $region2: #{tpu_custom_call.1} parent=1 // pred_check
      _
    $region3: #{tpu_custom_call.1} parent=1 // pred_check_branch
      %16 = sbr.rel (0) target = $region5
    $region4: #{tpu_custom_call.1} parent=1 // pred_region
      _
    $region5: #{tpu_custom_call.1} parent=1 // pred_fallthru
      _
    // Predicated region
    $region6: #{tpu_custom_call.1} parent=1 // pred_check
      _
    $region7: #{tpu_custom_call.1} parent=1 // pred_check_branch
      %18 = sbr.rel (0) target = $region9
    $region8: #{tpu_custom_call.1} parent=1 // pred_region
      %20 = vsyncadd [#allocation4], 0
      %s21 = sshll.u32 %s1, 4
      %s22 = int_to_ptr.hbm [resolvable:$true] %s21
      %s23 = sshll.u32 [#allocation3], 4
      %s24 = int_to_ptr.vmem [resolvable:$true] %s23
      %29 = dma.hbm_to_vmem [thread:$0]  %s22, 256, %s24, [#allocation4], 128, 128, 8
    $region9: #{tpu_custom_call.1} parent=1 // pred_fallthru
      _
    // Predicated region
    $region10: #{tpu_custom_call.1} parent=1 // pred_check
      _
    $region11: #{tpu_custom_call.1} parent=1 // pred_check_branch
      %31 = sbr.rel (0) target = $region13
    $region12: #{tpu_custom_call.1} parent=1 // pred_region
      _
    $region13: #{tpu_custom_call.1} parent=1 // pred_fallthru
      _
    // Predicated region
    $region14: #{tpu_custom_call.1} parent=1 // pred_check
      _
    $region15: #{tpu_custom_call.1} parent=1 // pred_check_branch
      %33 = sbr.rel (0) target = $region17
    $region16: #{tpu_custom_call.1} parent=1 // pred_region
      _
    $region17: #{tpu_custom_call.1} parent=1 // pred_fallthru
      _
    // Predicated region
    $region18: #{tpu_custom_call.1} parent=1 // pred_check
      _
    $region19: #{tpu_custom_call.1} parent=1 // pred_check_branch
      %35 = sbr.rel (0) target = $region21
    $region20: #{tpu_custom_call.1} parent=1 // pred_region
      _
    $region21: #{tpu_custom_call.1} parent=1 // pred_fallthru
      _
    // Predicated region
    $region22: #{tpu_custom_call.1} parent=1 // pred_check
      _
    $region23: #{tpu_custom_call.1} parent=1 // pred_check_branch
      %37 = sbr.rel (0) target = $region25
    $region24: #{tpu_custom_call.1} parent=1 // pred_region
      _
    $region25: #{tpu_custom_call.1} parent=1 // pred_fallthru
      _
    // Predicated region
    $region26: #{tpu_custom_call.1} parent=1 // pred_check
      _
    $region27: #{tpu_custom_call.1} parent=1 // pred_check_branch
      %39 = sbr.rel (0) target = $region29
    $region28: #{tpu_custom_call.1} parent=1 // pred_region
      _
    $region29: #{tpu_custom_call.1} parent=1 // pred_fallthru
      _
    // Predicated region
    $region30: #{tpu_custom_call.1} parent=1 // pred_check
      _
    $region31: #{tpu_custom_call.1} parent=1 // pred_check_branch
      %41 = sbr.rel (0) target = $region33
    $region32: #{tpu_custom_call.1} parent=1 // pred_region
      _
    $region33: #{tpu_custom_call.1} parent=1 // pred_fallthru
      _
    // Predicated region
    $region34: #{tpu_custom_call.1} parent=1 // pred_check
      _
    $region35: #{tpu_custom_call.1} parent=1 // pred_check_branch
      %43 = sbr.rel (0) target = $region37
    $region36: #{tpu_custom_call.1} parent=1 // pred_region
      _
    $region37: #{tpu_custom_call.1} parent=1 // pred_fallthru
      _
    // Predicated region
    $region38: #{tpu_custom_call.1} parent=1 // pred_check
      _
    $region39: #{tpu_custom_call.1} parent=1 // pred_check_branch
      %45 = sbr.rel (0) target = $region41
    $region40: #{tpu_custom_call.1} parent=1 // pred_region
      %47 = dma.done [#allocation4], 256
    $region41: #{tpu_custom_call.1} parent=1 // pred_fallthru
      _
    %v48 = vld [vmem:[%s0] sm:$0xff]
    %v49 = vld [vmem:[%s0 + $0x8] sm:$0xff]
    %v50 = vld [vmem:[%s0 + $0x10] sm:$0xff]
    %v51 = vld [vmem:[%s0 + $0x18] sm:$0xff]
    %v52 = vld [vmem:[%s0 + $0x20] sm:$0xff]
    %v53 = vld [vmem:[%s0 + $0x28] sm:$0xff]
    %v54 = vld [vmem:[%s0 + $0x30] sm:$0xff]
    %v55 = vld [vmem:[%s0 + $0x38] sm:$0xff]
    %v56 = vld [vmem:[#allocation3] sm:$0xff]
    %v57 = vld [vmem:[#allocation3 + $0x8] sm:$0xff]
    %v58 = vld [vmem:[%s2] sm:$0xff]
    %v59 = vld [vmem:[%s2 + $0x8] sm:$0xff]
    %v60 = vld [vmem:[%s2 + $0x10] sm:$0xff]
    %v61 = vld [vmem:[%s2 + $0x18] sm:$0xff]
    %v62 = vld [vmem:[%s3] sm:$0x1]
    %v64 = vperm.slane %v62, 0
    %vm66 = vcmask 130048
    %v68 = vsel %vm66, %v48, 0
    %v71 = vsel %vm66, %v49, 0
    %v74 = vsel %vm66, %v50, 0
    %v77 = vsel %vm66, %v51, 0
    %v80 = vsel %vm66, %v52, 0
    %v83 = vsel %vm66, %v53, 0
    %v86 = vsel %vm66, %v54, 0
    %v89 = vsel %vm66, %v55, 0
    %91 = vmatpush.msra.mxu0 0.0
    %92 = vmatpush.msra.mxu0 0.0
    %93 = vmatpush.msra.mxu0 0.0
    %94 = vmatpush.msra.mxu0 0.0
    %95 = vmatpush.msra.mxu0 0.0
    %96 = vmatpush.msra.mxu0 0.0
    %97 = vmatpush.msra.mxu0 0.0
    %98 = vmatpush.msra.mxu0 0.0
    %99 = vmatpush.msra.mxu0 0.0
    %100 = vmatpush.msra.mxu0 0.0
    %101 = vmatpush.msra.mxu0 0.0
    %102 = vmatpush.msra.mxu0 0.0
    %103 = vmatpush.msra.mxu0 0.0
    %104 = vmatpush.msra.mxu0 0.0
    %105 = vmatpush.msra.mxu0 %v57
    %106 = vmatpush.msra.mxu0 %v56
    %107 = vmatmul.f32.gmra.mxu0 %v68
    %v108 = vpop.f32.mrf.mxu0
    %v109 = vadd.f32 %v64, %v108
    %110 = vmatmul.f32.gmra.mxu0 %v71
    %v111 = vpop.f32.mrf.mxu0
    %v112 = vadd.f32 %v64, %v111
    %113 = vmatmul.f32.gmra.mxu0 %v74
    %v114 = vpop.f32.mrf.mxu0
    %v115 = vadd.f32 %v64, %v114
    %116 = vmatmul.f32.gmra.mxu0 %v77
    %v117 = vpop.f32.mrf.mxu0
    %v118 = vadd.f32 %v64, %v117
    %119 = vmatmul.f32.gmra.mxu0 %v80
    %v120 = vpop.f32.mrf.mxu0
    %v121 = vadd.f32 %v64, %v120
    %122 = vmatmul.f32.gmra.mxu0 %v83
    %v123 = vpop.f32.mrf.mxu0
    %v124 = vadd.f32 %v64, %v123
    %125 = vmatmul.f32.gmra.mxu0 %v86
    %v126 = vpop.f32.mrf.mxu0
    %v127 = vadd.f32 %v64, %v126
    %128 = vmatmul.f32.gmra.mxu0 %v89
    %v129 = vpop.f32.mrf.mxu0
    %v130 = vadd.f32 %v64, %v129
    %131 = vdwg.mxu0
    %vm132 = vcmask 261120
    %133 = vst.msk [vmem:[#allocation2] sm:$0xff] %vm132, %v109
    %134 = vst.msk [vmem:[#allocation2 + $0x8] sm:$0xff] %vm132, %v112
    %135 = vst.msk [vmem:[#allocation2 + $0x10] sm:$0xff] %vm132, %v115
    %136 = vst.msk [vmem:[#allocation2 + $0x18] sm:$0xff] %vm132, %v118
    %137 = vst.msk [vmem:[#allocation2 + $0x20] sm:$0xff] %vm132, %v121
    %138 = vst.msk [vmem:[#allocation2 + $0x28] sm:$0xff] %vm132, %v124
    %139 = vst.msk [vmem:[#allocation2 + $0x30] sm:$0xff] %vm132, %v127
    %140 = vst.msk [vmem:[#allocation2 + $0x38] sm:$0xff] %vm132, %v130
    %v141 = vld [vmem:[#allocation2] sm:$0xff]
    %v143 = vsel %vm132, 0.0, 0
    %145 = vmatpush.msra.mxu0 0.0
    %146 = vmatpush.msra.mxu0 0.0
    %147 = vmatpush.msra.mxu0 0.0
    %148 = vmatpush.msra.mxu0 0.0
    %149 = vmatpush.msra.mxu0 0.0
    %150 = vmatpush.msra.mxu0 0.0
    %151 = vmatpush.msra.mxu0 0.0
    %152 = vmatpush.msra.mxu0 0.0
    %153 = vmatpush.msra.mxu0 0.0
    %154 = vmatpush.msra.mxu0 0.0
    %155 = vmatpush.msra.mxu0 0.0
    %156 = vmatpush.msra.mxu0 0.0
    %157 = vmatpush.msra.mxu0 %v61
    %158 = vmatpush.msra.mxu0 %v60
    %159 = vmatpush.msra.mxu0 %v59
    %160 = vmatpush.msra.mxu0 %v58
    %161 = vmatmul.f32.gmra.mxu0 %v143
    %v162 = vpop.f32.mrf.mxu0
    %v163 = vadd.f32 0.0, %v162
    %164 = vdwg.mxu0
    %v165 = vadd.f32 %v141, %v163
    %v166 = vtanh.pop %v165
    %167 = vst.msk [vmem:[#allocation2] sm:$0xff] %vm132, %v166
    %v168 = vld [vmem:[#allocation2 + $0x8] sm:$0xff]
    %v170 = vsel %vm132, %v166, 0
    %172 = vmatpush.msra.mxu0 0.0
    %173 = vmatpush.msra.mxu0 0.0
    %174 = vmatpush.msra.mxu0 0.0
    %175 = vmatpush.msra.mxu0 0.0
    %176 = vmatpush.msra.mxu0 0.0
    %177 = vmatpush.msra.mxu0 0.0
    %178 = vmatpush.msra.mxu0 0.0
    %179 = vmatpush.msra.mxu0 0.0
    %180 = vmatpush.msra.mxu0 0.0
    %181 = vmatpush.msra.mxu0 0.0
    %182 = vmatpush.msra.mxu0 0.0
    %183 = vmatpush.msra.mxu0 0.0
    %184 = vmatpush.msra.mxu0 %v61
    %185 = vmatpush.msra.mxu0 %v60
    %186 = vmatpush.msra.mxu0 %v59
    %187 = vmatpush.msra.mxu0 %v58
    %188 = vmatmul.f32.gmra.mxu0 %v170
    %v189 = vpop.f32.mrf.mxu0
    %v190 = vadd.f32 0.0, %v189
    %191 = vdwg.mxu0
    %v192 = vadd.f32 %v168, %v190
    %v193 = vtanh.pop %v192
    %194 = vst.msk [vmem:[#allocation2 + $0x8] sm:$0xff] %vm132, %v193
    %v195 = vld [vmem:[#allocation2 + $0x10] sm:$0xff]
    %v197 = vsel %vm132, %v193, 0
    %199 = vmatpush.msra.mxu0 0.0
    %200 = vmatpush.msra.mxu0 0.0
    %201 = vmatpush.msra.mxu0 0.0
    %202 = vmatpush.msra.mxu0 0.0
    %203 = vmatpush.msra.mxu0 0.0
    %204 = vmatpush.msra.mxu0 0.0
    %205 = vmatpush.msra.mxu0 0.0
    %206 = vmatpush.msra.mxu0 0.0
    %207 = vmatpush.msra.mxu0 0.0
    %208 = vmatpush.msra.mxu0 0.0
    %209 = vmatpush.msra.mxu0 0.0
    %210 = vmatpush.msra.mxu0 0.0
    %211 = vmatpush.msra.mxu0 %v61
    %212 = vmatpush.msra.mxu0 %v60
    %213 = vmatpush.msra.mxu0 %v59
    %214 = vmatpush.msra.mxu0 %v58
    %215 = vmatmul.f32.gmra.mxu0 %v197
    %v216 = vpop.f32.mrf.mxu0
    %v217 = vadd.f32 0.0, %v216
    %218 = vdwg.mxu0
    %v219 = vadd.f32 %v195, %v217
    %v220 = vtanh.pop %v219
    %221 = vst.msk [vmem:[#allocation2 + $0x10] sm:$0xff] %vm132, %v220
    %v222 = vld [vmem:[#allocation2 + $0x18] sm:$0xff]
    %v224 = vsel %vm132, %v220, 0
    %226 = vmatpush.msra.mxu0 0.0
    %227 = vmatpush.msra.mxu0 0.0
    %228 = vmatpush.msra.mxu0 0.0
    %229 = vmatpush.msra.mxu0 0.0
    %230 = vmatpush.msra.mxu0 0.0
    %231 = vmatpush.msra.mxu0 0.0
    %232 = vmatpush.msra.mxu0 0.0
    %233 = vmatpush.msra.mxu0 0.0
    %234 = vmatpush.msra.mxu0 0.0
    %235 = vmatpush.msra.mxu0 0.0
    %236 = vmatpush.msra.mxu0 0.0
    %237 = vmatpush.msra.mxu0 0.0
    %238 = vmatpush.msra.mxu0 %v61
    %239 = vmatpush.msra.mxu0 %v60
    %240 = vmatpush.msra.mxu0 %v59
    %241 = vmatpush.msra.mxu0 %v58
    %242 = vmatmul.f32.gmra.mxu0 %v224
    %v243 = vpop.f32.mrf.mxu0
    %v244 = vadd.f32 0.0, %v243
    %245 = vdwg.mxu0
    %v246 = vadd.f32 %v222, %v244
    %v247 = vtanh.pop %v246
    %248 = vst.msk [vmem:[#allocation2 + $0x18] sm:$0xff] %vm132, %v247
    %v249 = vld [vmem:[#allocation2 + $0x20] sm:$0xff]
    %v251 = vsel %vm132, %v247, 0
    %253 = vmatpush.msra.mxu0 0.0
    %254 = vmatpush.msra.mxu0 0.0
    %255 = vmatpush.msra.mxu0 0.0
    %256 = vmatpush.msra.mxu0 0.0
    %257 = vmatpush.msra.mxu0 0.0
    %258 = vmatpush.msra.mxu0 0.0
    %259 = vmatpush.msra.mxu0 0.0
    %260 = vmatpush.msra.mxu0 0.0
    %261 = vmatpush.msra.mxu0 0.0
    %262 = vmatpush.msra.mxu0 0.0
    %263 = vmatpush.msra.mxu0 0.0
    %264 = vmatpush.msra.mxu0 0.0
    %265 = vmatpush.msra.mxu0 %v61
    %266 = vmatpush.msra.mxu0 %v60
    %267 = vmatpush.msra.mxu0 %v59
    %268 = vmatpush.msra.mxu0 %v58
    %269 = vmatmul.f32.gmra.mxu0 %v251
    %v270 = vpop.f32.mrf.mxu0
    %v271 = vadd.f32 0.0, %v270
    %272 = vdwg.mxu0
    %v273 = vadd.f32 %v249, %v271
    %v274 = vtanh.pop %v273
    %275 = vst.msk [vmem:[#allocation2 + $0x20] sm:$0xff] %vm132, %v274
    %v276 = vld [vmem:[#allocation2 + $0x28] sm:$0xff]
    %v278 = vsel %vm132, %v274, 0
    %280 = vmatpush.msra.mxu0 0.0
    %281 = vmatpush.msra.mxu0 0.0
    %282 = vmatpush.msra.mxu0 0.0
    %283 = vmatpush.msra.mxu0 0.0
    %284 = vmatpush.msra.mxu0 0.0
    %285 = vmatpush.msra.mxu0 0.0
    %286 = vmatpush.msra.mxu0 0.0
    %287 = vmatpush.msra.mxu0 0.0
    %288 = vmatpush.msra.mxu0 0.0
    %289 = vmatpush.msra.mxu0 0.0
    %290 = vmatpush.msra.mxu0 0.0
    %291 = vmatpush.msra.mxu0 0.0
    %292 = vmatpush.msra.mxu0 %v61
    %293 = vmatpush.msra.mxu0 %v60
    %294 = vmatpush.msra.mxu0 %v59
    %295 = vmatpush.msra.mxu0 %v58
    %296 = vmatmul.f32.gmra.mxu0 %v278
    %v297 = vpop.f32.mrf.mxu0
    %v298 = vadd.f32 0.0, %v297
    %299 = vdwg.mxu0
    %v300 = vadd.f32 %v276, %v298
    %v301 = vtanh.pop %v300
    %302 = vst.msk [vmem:[#allocation2 + $0x28] sm:$0xff] %vm132, %v301
    %v303 = vld [vmem:[#allocation2 + $0x30] sm:$0xff]
    %v305 = vsel %vm132, %v301, 0
    %307 = vmatpush.msra.mxu0 0.0
    %308 = vmatpush.msra.mxu0 0.0
    %309 = vmatpush.msra.mxu0 0.0
    %310 = vmatpush.msra.mxu0 0.0
    %311 = vmatpush.msra.mxu0 0.0
    %312 = vmatpush.msra.mxu0 0.0
    %313 = vmatpush.msra.mxu0 0.0
    %314 = vmatpush.msra.mxu0 0.0
    %315 = vmatpush.msra.mxu0 0.0
    %316 = vmatpush.msra.mxu0 0.0
    %317 = vmatpush.msra.mxu0 0.0
    %318 = vmatpush.msra.mxu0 0.0
    %319 = vmatpush.msra.mxu0 %v61
    %320 = vmatpush.msra.mxu0 %v60
    %321 = vmatpush.msra.mxu0 %v59
    %322 = vmatpush.msra.mxu0 %v58
    %323 = vmatmul.f32.gmra.mxu0 %v305
    %v324 = vpop.f32.mrf.mxu0
    %v325 = vadd.f32 0.0, %v324
    %326 = vdwg.mxu0
    %v327 = vadd.f32 %v303, %v325
    %v328 = vtanh.pop %v327
    %329 = vst.msk [vmem:[#allocation2 + $0x30] sm:$0xff] %vm132, %v328
    %v330 = vld [vmem:[#allocation2 + $0x38] sm:$0xff]
    %v332 = vsel %vm132, %v328, 0
    %334 = vmatpush.msra.mxu0 0.0
    %335 = vmatpush.msra.mxu0 0.0
    %336 = vmatpush.msra.mxu0 0.0
    %337 = vmatpush.msra.mxu0 0.0
    %338 = vmatpush.msra.mxu0 0.0
    %339 = vmatpush.msra.mxu0 0.0
    %340 = vmatpush.msra.mxu0 0.0
    %341 = vmatpush.msra.mxu0 0.0
    %342 = vmatpush.msra.mxu0 0.0
    %343 = vmatpush.msra.mxu0 0.0
    %344 = vmatpush.msra.mxu0 0.0
    %345 = vmatpush.msra.mxu0 0.0
    %346 = vmatpush.msra.mxu0 %v61
    %347 = vmatpush.msra.mxu0 %v60
    %348 = vmatpush.msra.mxu0 %v59
    %349 = vmatpush.msra.mxu0 %v58
    %350 = vmatmul.f32.gmra.mxu0 %v332
    %v351 = vpop.f32.mrf.mxu0
    %v352 = vadd.f32 0.0, %v351
    %353 = vdwg.mxu0
    %v354 = vadd.f32 %v330, %v352
    %v355 = vtanh.pop %v354
    %356 = vst.msk [vmem:[#allocation2 + $0x38] sm:$0xff] %vm132, %v355
    %v357 = vld [vmem:[#allocation2] sm:$0xff]
    %v358 = vld [vmem:[#allocation2 + $0x8] sm:$0xff]
    %v359 = vld [vmem:[#allocation2 + $0x10] sm:$0xff]
    %v360 = vld [vmem:[#allocation2 + $0x18] sm:$0xff]
    %v361 = vld [vmem:[#allocation2 + $0x20] sm:$0xff]
    %v362 = vld [vmem:[#allocation2 + $0x28] sm:$0xff]
    %v363 = vld [vmem:[#allocation2 + $0x30] sm:$0xff]
    %v364 = vld [vmem:[#allocation2 + $0x38] sm:$0xff]
    %v365 = vld [vmem:[%s4] sm:$0xff]
    %v366 = vld [vmem:[%s4 + $0x8] sm:$0xff]
    %v367 = vld [vmem:[%s4 + $0x10] sm:$0xff]
    %v368 = vld [vmem:[%s4 + $0x18] sm:$0xff]
    %v369 = vld [vmem:[%s5] sm:$0xff]
    %v370 = vld [vmem:[%s5 + $0x8] sm:$0xff]
    %v371 = vld [vmem:[%s5 + $0x10] sm:$0xff]
    %v372 = vld [vmem:[%s5 + $0x18] sm:$0xff]
    %v373 = vld [vmem:[%s6] sm:$0x1]
    %v375 = vperm.slane %v373, 0
    %v378 = vsel %vm132, %v357, 0
    %v381 = vsel %vm132, %v358, 0
    %v384 = vsel %vm132, %v359, 0
    %v387 = vsel %vm132, %v360, 0
    %v390 = vsel %vm132, %v361, 0
    %v393 = vsel %vm132, %v362, 0
    %v396 = vsel %vm132, %v363, 0
    %v399 = vsel %vm132, %v364, 0
    %401 = vmatpush.msra.mxu0 0.0
    %402 = vmatpush.msra.mxu0 0.0
    %403 = vmatpush.msra.mxu0 0.0
    %404 = vmatpush.msra.mxu0 0.0
    %405 = vmatpush.msra.mxu0 0.0
    %406 = vmatpush.msra.mxu0 0.0
    %407 = vmatpush.msra.mxu0 0.0
    %408 = vmatpush.msra.mxu0 0.0
    %409 = vmatpush.msra.mxu0 0.0
    %410 = vmatpush.msra.mxu0 0.0
    %411 = vmatpush.msra.mxu0 0.0
    %412 = vmatpush.msra.mxu0 0.0
    %413 = vmatpush.msra.mxu0 %v368
    %414 = vmatpush.msra.mxu0 %v367
    %415 = vmatpush.msra.mxu0 %v366
    %416 = vmatpush.msra.mxu0 %v365
    %417 = vmatmul.f32.gmra.mxu0 %v378
    %v418 = vpop.f32.mrf.mxu0
    %v419 = vadd.f32 %v375, %v418
    %420 = vmatmul.f32.gmra.mxu0 %v381
    %v421 = vpop.f32.mrf.mxu0
    %v422 = vadd.f32 %v375, %v421
    %423 = vmatmul.f32.gmra.mxu0 %v384
    %v424 = vpop.f32.mrf.mxu0
    %v425 = vadd.f32 %v375, %v424
    %426 = vmatmul.f32.gmra.mxu0 %v387
    %v427 = vpop.f32.mrf.mxu0
    %v428 = vadd.f32 %v375, %v427
    %429 = vmatmul.f32.gmra.mxu0 %v390
    %v430 = vpop.f32.mrf.mxu0
    %v431 = vadd.f32 %v375, %v430
    %432 = vmatmul.f32.gmra.mxu0 %v393
    %v433 = vpop.f32.mrf.mxu0
    %v434 = vadd.f32 %v375, %v433
    %435 = vmatmul.f32.gmra.mxu0 %v396
    %v436 = vpop.f32.mrf.mxu0
    %v437 = vadd.f32 %v375, %v436
    %438 = vmatmul.f32.gmra.mxu0 %v399
    %v439 = vpop.f32.mrf.mxu0
    %v440 = vadd.f32 %v375, %v439
    %441 = vdwg.mxu0
    %442 = vst.msk [vmem:[#allocation2] sm:$0xff] %vm132, %v419
    %443 = vst.msk [vmem:[#allocation2 + $0x8] sm:$0xff] %vm132, %v422
    %444 = vst.msk [vmem:[#allocation2 + $0x10] sm:$0xff] %vm132, %v425
    %445 = vst.msk [vmem:[#allocation2 + $0x18] sm:$0xff] %vm132, %v428
    %446 = vst.msk [vmem:[#allocation2 + $0x20] sm:$0xff] %vm132, %v431
    %447 = vst.msk [vmem:[#allocation2 + $0x28] sm:$0xff] %vm132, %v434
    %448 = vst.msk [vmem:[#allocation2 + $0x30] sm:$0xff] %vm132, %v437
    %449 = vst.msk [vmem:[#allocation2 + $0x38] sm:$0xff] %vm132, %v440
    %v450 = vld [vmem:[#allocation2] sm:$0xff]
    %451 = vmatpush.msra.mxu0 0.0
    %452 = vmatpush.msra.mxu0 0.0
    %453 = vmatpush.msra.mxu0 0.0
    %454 = vmatpush.msra.mxu0 0.0
    %455 = vmatpush.msra.mxu0 0.0
    %456 = vmatpush.msra.mxu0 0.0
    %457 = vmatpush.msra.mxu0 0.0
    %458 = vmatpush.msra.mxu0 0.0
    %459 = vmatpush.msra.mxu0 0.0
    %460 = vmatpush.msra.mxu0 0.0
    %461 = vmatpush.msra.mxu0 0.0
    %462 = vmatpush.msra.mxu0 0.0
    %463 = vmatpush.msra.mxu0 %v372
    %464 = vmatpush.msra.mxu0 %v371
    %465 = vmatpush.msra.mxu0 %v370
    %466 = vmatpush.msra.mxu0 %v369
    %467 = vmatmul.f32.gmra.mxu0 %v143
    %v468 = vpop.f32.mrf.mxu0
    %v469 = vadd.f32 0.0, %v468
    %470 = vdwg.mxu0
    %v471 = vadd.f32 %v450, %v469
    %v472 = vtanh.pop %v471
    %473 = vst.msk [vmem:[#allocation2] sm:$0xff] %vm132, %v472
    %v474 = vld [vmem:[#allocation2 + $0x8] sm:$0xff]
    %v476 = vsel %vm132, %v472, 0
    %478 = vmatpush.msra.mxu0 0.0
    %479 = vmatpush.msra.mxu0 0.0
    %480 = vmatpush.msra.mxu0 0.0
    %481 = vmatpush.msra.mxu0 0.0
    %482 = vmatpush.msra.mxu0 0.0
    %483 = vmatpush.msra.mxu0 0.0
    %484 = vmatpush.msra.mxu0 0.0
    %485 = vmatpush.msra.mxu0 0.0
    %486 = vmatpush.msra.mxu0 0.0
    %487 = vmatpush.msra.mxu0 0.0
    %488 = vmatpush.msra.mxu0 0.0
    %489 = vmatpush.msra.mxu0 0.0
    %490 = vmatpush.msra.mxu0 %v372
    %491 = vmatpush.msra.mxu0 %v371
    %492 = vmatpush.msra.mxu0 %v370
    %493 = vmatpush.msra.mxu0 %v369
    %494 = vmatmul.f32.gmra.mxu0 %v476
    %v495 = vpop.f32.mrf.mxu0
    %v496 = vadd.f32 0.0, %v495
    %497 = vdwg.mxu0
    %v498 = vadd.f32 %v474, %v496
    %v499 = vtanh.pop %v498
    %500 = vst.msk [vmem:[#allocation2 + $0x8] sm:$0xff] %vm132, %v499
    %v501 = vld [vmem:[#allocation2 + $0x10] sm:$0xff]
    %v503 = vsel %vm132, %v499, 0
    %505 = vmatpush.msra.mxu0 0.0
    %506 = vmatpush.msra.mxu0 0.0
    %507 = vmatpush.msra.mxu0 0.0
    %508 = vmatpush.msra.mxu0 0.0
    %509 = vmatpush.msra.mxu0 0.0
    %510 = vmatpush.msra.mxu0 0.0
    %511 = vmatpush.msra.mxu0 0.0
    %512 = vmatpush.msra.mxu0 0.0
    %513 = vmatpush.msra.mxu0 0.0
    %514 = vmatpush.msra.mxu0 0.0
    %515 = vmatpush.msra.mxu0 0.0
    %516 = vmatpush.msra.mxu0 0.0
    %517 = vmatpush.msra.mxu0 %v372
    %518 = vmatpush.msra.mxu0 %v371
    %519 = vmatpush.msra.mxu0 %v370
    %520 = vmatpush.msra.mxu0 %v369
    %521 = vmatmul.f32.gmra.mxu0 %v503
    %v522 = vpop.f32.mrf.mxu0
    %v523 = vadd.f32 0.0, %v522
    %524 = vdwg.mxu0
    %v525 = vadd.f32 %v501, %v523
    %v526 = vtanh.pop %v525
    %527 = vst.msk [vmem:[#allocation2 + $0x10] sm:$0xff] %vm132, %v526
    %v528 = vld [vmem:[#allocation2 + $0x18] sm:$0xff]
    %v530 = vsel %vm132, %v526, 0
    %532 = vmatpush.msra.mxu0 0.0
    %533 = vmatpush.msra.mxu0 0.0
    %534 = vmatpush.msra.mxu0 0.0
    %535 = vmatpush.msra.mxu0 0.0
    %536 = vmatpush.msra.mxu0 0.0
    %537 = vmatpush.msra.mxu0 0.0
    %538 = vmatpush.msra.mxu0 0.0
    %539 = vmatpush.msra.mxu0 0.0
    %540 = vmatpush.msra.mxu0 0.0
    %541 = vmatpush.msra.mxu0 0.0
    %542 = vmatpush.msra.mxu0 0.0
    %543 = vmatpush.msra.mxu0 0.0
    %544 = vmatpush.msra.mxu0 %v372
    %545 = vmatpush.msra.mxu0 %v371
    %546 = vmatpush.msra.mxu0 %v370
    %547 = vmatpush.msra.mxu0 %v369
    %548 = vmatmul.f32.gmra.mxu0 %v530
    %v549 = vpop.f32.mrf.mxu0
    %v550 = vadd.f32 0.0, %v549
    %551 = vdwg.mxu0
    %v552 = vadd.f32 %v528, %v550
    %v553 = vtanh.pop %v552
    %554 = vst.msk [vmem:[#allocation2 + $0x18] sm:$0xff] %vm132, %v553
    %v555 = vld [vmem:[#allocation2 + $0x20] sm:$0xff]
    %v557 = vsel %vm132, %v553, 0
    %559 = vmatpush.msra.mxu0 0.0
    %560 = vmatpush.msra.mxu0 0.0
    %561 = vmatpush.msra.mxu0 0.0
    %562 = vmatpush.msra.mxu0 0.0
    %563 = vmatpush.msra.mxu0 0.0
    %564 = vmatpush.msra.mxu0 0.0
    %565 = vmatpush.msra.mxu0 0.0
    %566 = vmatpush.msra.mxu0 0.0
    %567 = vmatpush.msra.mxu0 0.0
    %568 = vmatpush.msra.mxu0 0.0
    %569 = vmatpush.msra.mxu0 0.0
    %570 = vmatpush.msra.mxu0 0.0
    %571 = vmatpush.msra.mxu0 %v372
    %572 = vmatpush.msra.mxu0 %v371
    %573 = vmatpush.msra.mxu0 %v370
    %574 = vmatpush.msra.mxu0 %v369
    %575 = vmatmul.f32.gmra.mxu0 %v557
    %v576 = vpop.f32.mrf.mxu0
    %v577 = vadd.f32 0.0, %v576
    %578 = vdwg.mxu0
    %v579 = vadd.f32 %v555, %v577
    %v580 = vtanh.pop %v579
    %581 = vst.msk [vmem:[#allocation2 + $0x20] sm:$0xff] %vm132, %v580
    %v582 = vld [vmem:[#allocation2 + $0x28] sm:$0xff]
    %v584 = vsel %vm132, %v580, 0
    %586 = vmatpush.msra.mxu0 0.0
    %587 = vmatpush.msra.mxu0 0.0
    %588 = vmatpush.msra.mxu0 0.0
    %589 = vmatpush.msra.mxu0 0.0
    %590 = vmatpush.msra.mxu0 0.0
    %591 = vmatpush.msra.mxu0 0.0
    %592 = vmatpush.msra.mxu0 0.0
    %593 = vmatpush.msra.mxu0 0.0
    %594 = vmatpush.msra.mxu0 0.0
    %595 = vmatpush.msra.mxu0 0.0
    %596 = vmatpush.msra.mxu0 0.0
    %597 = vmatpush.msra.mxu0 0.0
    %598 = vmatpush.msra.mxu0 %v372
    %599 = vmatpush.msra.mxu0 %v371
    %600 = vmatpush.msra.mxu0 %v370
    %601 = vmatpush.msra.mxu0 %v369
    %602 = vmatmul.f32.gmra.mxu0 %v584
    %v603 = vpop.f32.mrf.mxu0
    %v604 = vadd.f32 0.0, %v603
    %605 = vdwg.mxu0
    %v606 = vadd.f32 %v582, %v604
    %v607 = vtanh.pop %v606
    %608 = vst.msk [vmem:[#allocation2 + $0x28] sm:$0xff] %vm132, %v607
    %v609 = vld [vmem:[#allocation2 + $0x30] sm:$0xff]
    %v611 = vsel %vm132, %v607, 0
    %613 = vmatpush.msra.mxu0 0.0
    %614 = vmatpush.msra.mxu0 0.0
    %615 = vmatpush.msra.mxu0 0.0
    %616 = vmatpush.msra.mxu0 0.0
    %617 = vmatpush.msra.mxu0 0.0
    %618 = vmatpush.msra.mxu0 0.0
    %619 = vmatpush.msra.mxu0 0.0
    %620 = vmatpush.msra.mxu0 0.0
    %621 = vmatpush.msra.mxu0 0.0
    %622 = vmatpush.msra.mxu0 0.0
    %623 = vmatpush.msra.mxu0 0.0
    %624 = vmatpush.msra.mxu0 0.0
    %625 = vmatpush.msra.mxu0 %v372
    %626 = vmatpush.msra.mxu0 %v371
    %627 = vmatpush.msra.mxu0 %v370
    %628 = vmatpush.msra.mxu0 %v369
    %629 = vmatmul.f32.gmra.mxu0 %v611
    %v630 = vpop.f32.mrf.mxu0
    %v631 = vadd.f32 0.0, %v630
    %632 = vdwg.mxu0
    %v633 = vadd.f32 %v609, %v631
    %v634 = vtanh.pop %v633
    %635 = vst.msk [vmem:[#allocation2 + $0x30] sm:$0xff] %vm132, %v634
    %v636 = vld [vmem:[#allocation2 + $0x38] sm:$0xff]
    %v638 = vsel %vm132, %v634, 0
    %640 = vmatpush.msra.mxu0 0.0
    %641 = vmatpush.msra.mxu0 0.0
    %642 = vmatpush.msra.mxu0 0.0
    %643 = vmatpush.msra.mxu0 0.0
    %644 = vmatpush.msra.mxu0 0.0
    %645 = vmatpush.msra.mxu0 0.0
    %646 = vmatpush.msra.mxu0 0.0
    %647 = vmatpush.msra.mxu0 0.0
    %648 = vmatpush.msra.mxu0 0.0
    %649 = vmatpush.msra.mxu0 0.0
    %650 = vmatpush.msra.mxu0 0.0
    %651 = vmatpush.msra.mxu0 0.0
    %652 = vmatpush.msra.mxu0 %v372
    %653 = vmatpush.msra.mxu0 %v371
    %654 = vmatpush.msra.mxu0 %v370
    %655 = vmatpush.msra.mxu0 %v369
    %656 = vmatmul.f32.gmra.mxu0 %v638
    %v657 = vpop.f32.mrf.mxu0
    %v658 = vadd.f32 0.0, %v657
    %659 = vdwg.mxu0
    %v660 = vadd.f32 %v636, %v658
    %v661 = vtanh.pop %v660
    %662 = vst.msk [vmem:[#allocation2 + $0x38] sm:$0xff] %vm132, %v661
    %v663 = vld [vmem:[#allocation2] sm:$0xff]
    %v664 = vld [vmem:[#allocation2 + $0x8] sm:$0xff]
    %v665 = vld [vmem:[#allocation2 + $0x10] sm:$0xff]
    %v666 = vld [vmem:[#allocation2 + $0x18] sm:$0xff]
    %v667 = vld [vmem:[#allocation2 + $0x20] sm:$0xff]
    %v668 = vld [vmem:[#allocation2 + $0x28] sm:$0xff]
    %v669 = vld [vmem:[#allocation2 + $0x30] sm:$0xff]
    %v670 = vld [vmem:[#allocation2 + $0x38] sm:$0xff]
    %v671 = vld [vmem:[%s7] sm:$0xff]
    %v672 = vld [vmem:[%s7 + $0x8] sm:$0xff]
    %v673 = vld [vmem:[%s7 + $0x10] sm:$0xff]
    %v674 = vld [vmem:[%s7 + $0x18] sm:$0xff]
    %v675 = vld [vmem:[%s8] sm:$0x1]
    %v677 = vperm.slane %v675, 0
    %v680 = vsel %vm132, %v663, 0
    %v683 = vsel %vm132, %v664, 0
    %v686 = vsel %vm132, %v665, 0
    %v689 = vsel %vm132, %v666, 0
    %v692 = vsel %vm132, %v667, 0
    %v695 = vsel %vm132, %v668, 0
    %v698 = vsel %vm132, %v669, 0
    %v701 = vsel %vm132, %v670, 0
    %703 = vmatpush.msra.mxu0 0.0
    %704 = vmatpush.msra.mxu0 0.0
    %705 = vmatpush.msra.mxu0 0.0
    %706 = vmatpush.msra.mxu0 0.0
    %707 = vmatpush.msra.mxu0 0.0
    %708 = vmatpush.msra.mxu0 0.0
    %709 = vmatpush.msra.mxu0 0.0
    %710 = vmatpush.msra.mxu0 0.0
    %711 = vmatpush.msra.mxu0 0.0
    %712 = vmatpush.msra.mxu0 0.0
    %713 = vmatpush.msra.mxu0 0.0
    %714 = vmatpush.msra.mxu0 0.0
    %715 = vmatpush.msra.mxu0 %v674
    %716 = vmatpush.msra.mxu0 %v673
    %717 = vmatpush.msra.mxu0 %v672
    %718 = vmatpush.msra.mxu0 %v671
    %719 = vmatmul.f32.gmra.mxu0 %v680
    %v720 = vpop.f32.mrf.mxu0
    %v721 = vadd.f32 %v677, %v720
    %722 = vmatmul.f32.gmra.mxu0 %v683
    %v723 = vpop.f32.mrf.mxu0
    %v724 = vadd.f32 %v677, %v723
    %725 = vmatmul.f32.gmra.mxu0 %v686
    %v726 = vpop.f32.mrf.mxu0
    %v727 = vadd.f32 %v677, %v726
    %728 = vmatmul.f32.gmra.mxu0 %v689
    %v729 = vpop.f32.mrf.mxu0
    %v730 = vadd.f32 %v677, %v729
    %731 = vmatmul.f32.gmra.mxu0 %v692
    %v732 = vpop.f32.mrf.mxu0
    %v733 = vadd.f32 %v677, %v732
    %734 = vmatmul.f32.gmra.mxu0 %v695
    %v735 = vpop.f32.mrf.mxu0
    %v736 = vadd.f32 %v677, %v735
    %737 = vmatmul.f32.gmra.mxu0 %v698
    %v738 = vpop.f32.mrf.mxu0
    %v739 = vadd.f32 %v677, %v738
    %740 = vmatmul.f32.gmra.mxu0 %v701
    %v741 = vpop.f32.mrf.mxu0
    %v742 = vadd.f32 %v677, %v741
    %743 = vdwg.mxu0
    %v744 = vxor.u32 %v721, 2147483648
    %v745 = vxor.u32 %v724, 2147483648
    %v746 = vxor.u32 %v727, 2147483648
    %v747 = vxor.u32 %v730, 2147483648
    %v748 = vxor.u32 %v733, 2147483648
    %v749 = vxor.u32 %v736, 2147483648
    %v750 = vxor.u32 %v739, 2147483648
    %v751 = vxor.u32 %v742, 2147483648
    %v752 = vmul.f32 %v744, 1.442695
    %v753 = vpow.pop %v752
    %v754 = vmul.f32 %v745, 1.442695
    %v755 = vpow.pop %v754
    %v756 = vmul.f32 %v746, 1.442695
    %v757 = vpow.pop %v756
    %v758 = vmul.f32 %v747, 1.442695
    %v759 = vpow.pop %v758
    %v760 = vmul.f32 %v748, 1.442695
    %v761 = vpow.pop %v760
    %v762 = vmul.f32 %v749, 1.442695
    %v763 = vpow.pop %v762
    %v764 = vmul.f32 %v750, 1.442695
    %v765 = vpow.pop %v764
    %v766 = vmul.f32 %v751, 1.442695
    %v767 = vpow.pop %v766
    %v768 = vadd.f32 %v753, 1.0
    %v769 = vadd.f32 %v755, 1.0
    %v770 = vadd.f32 %v757, 1.0
    %v771 = vadd.f32 %v759, 1.0
    %v772 = vadd.f32 %v761, 1.0
    %v773 = vadd.f32 %v763, 1.0
    %v774 = vadd.f32 %v765, 1.0
    %v775 = vadd.f32 %v767, 1.0
    %v776 = vrcp.pop %v768
    %v777 = vmul.f32 %v768, %v776
    %v778 = vsub.f32 1.0, %v777
    %v779 = vmul.f32 %v776, %v778
    %v780 = vadd.f32 %v776, %v779
    %vm781 = vweird.f32 %v768
    %vm782 = vweird.f32 %v776
    %vm783 = vmor %vm781, %vm782
    %v784 = vsel %vm783, %v776, %v780
    %v785 = vand.u32 2147483647, %v768
    %vm786 = vcmp.eq.f32.partialorder %v785, 8.507059e+37
    %v787 = vand.u32 %v768, 2147483648
    %v788 = vor.u32 1.1754944e-38, %v787
    %v789 = vsel %vm786, %v788, %v784
    %v790 = vmul.f32 1.0, %v789
    %v791 = vrcp.pop %v769
    %v792 = vmul.f32 %v769, %v791
    %v793 = vsub.f32 1.0, %v792
    %v794 = vmul.f32 %v791, %v793
    %v795 = vadd.f32 %v791, %v794
    %vm796 = vweird.f32 %v769
    %vm797 = vweird.f32 %v791
    %vm798 = vmor %vm796, %vm797
    %v799 = vsel %vm798, %v791, %v795
    %v800 = vand.u32 2147483647, %v769
    %vm801 = vcmp.eq.f32.partialorder %v800, 8.507059e+37
    %v802 = vand.u32 %v769, 2147483648
    %v803 = vor.u32 1.1754944e-38, %v802
    %v804 = vsel %vm801, %v803, %v799
    %v805 = vmul.f32 1.0, %v804
    %v806 = vrcp.pop %v770
    %v807 = vmul.f32 %v770, %v806
    %v808 = vsub.f32 1.0, %v807
    %v809 = vmul.f32 %v806, %v808
    %v810 = vadd.f32 %v806, %v809
    %vm811 = vweird.f32 %v770
    %vm812 = vweird.f32 %v806
    %vm813 = vmor %vm811, %vm812
    %v814 = vsel %vm813, %v806, %v810
    %v815 = vand.u32 2147483647, %v770
    %vm816 = vcmp.eq.f32.partialorder %v815, 8.507059e+37
    %v817 = vand.u32 %v770, 2147483648
    %v818 = vor.u32 1.1754944e-38, %v817
    %v819 = vsel %vm816, %v818, %v814
    %v820 = vmul.f32 1.0, %v819
    %v821 = vrcp.pop %v771
    %v822 = vmul.f32 %v771, %v821
    %v823 = vsub.f32 1.0, %v822
    %v824 = vmul.f32 %v821, %v823
    %v825 = vadd.f32 %v821, %v824
    %vm826 = vweird.f32 %v771
    %vm827 = vweird.f32 %v821
    %vm828 = vmor %vm826, %vm827
    %v829 = vsel %vm828, %v821, %v825
    %v830 = vand.u32 2147483647, %v771
    %vm831 = vcmp.eq.f32.partialorder %v830, 8.507059e+37
    %v832 = vand.u32 %v771, 2147483648
    %v833 = vor.u32 1.1754944e-38, %v832
    %v834 = vsel %vm831, %v833, %v829
    %v835 = vmul.f32 1.0, %v834
    %v836 = vrcp.pop %v772
    %v837 = vmul.f32 %v772, %v836
    %v838 = vsub.f32 1.0, %v837
    %v839 = vmul.f32 %v836, %v838
    %v840 = vadd.f32 %v836, %v839
    %vm841 = vweird.f32 %v772
    %vm842 = vweird.f32 %v836
    %vm843 = vmor %vm841, %vm842
    %v844 = vsel %vm843, %v836, %v840
    %v845 = vand.u32 2147483647, %v772
    %vm846 = vcmp.eq.f32.partialorder %v845, 8.507059e+37
    %v847 = vand.u32 %v772, 2147483648
    %v848 = vor.u32 1.1754944e-38, %v847
    %v849 = vsel %vm846, %v848, %v844
    %v850 = vmul.f32 1.0, %v849
    %v851 = vrcp.pop %v773
    %v852 = vmul.f32 %v773, %v851
    %v853 = vsub.f32 1.0, %v852
    %v854 = vmul.f32 %v851, %v853
    %v855 = vadd.f32 %v851, %v854
    %vm856 = vweird.f32 %v773
    %vm857 = vweird.f32 %v851
    %vm858 = vmor %vm856, %vm857
    %v859 = vsel %vm858, %v851, %v855
    %v860 = vand.u32 2147483647, %v773
    %vm861 = vcmp.eq.f32.partialorder %v860, 8.507059e+37
    %v862 = vand.u32 %v773, 2147483648
    %v863 = vor.u32 1.1754944e-38, %v862
    %v864 = vsel %vm861, %v863, %v859
    %v865 = vmul.f32 1.0, %v864
    %v866 = vrcp.pop %v774
    %v867 = vmul.f32 %v774, %v866
    %v868 = vsub.f32 1.0, %v867
    %v869 = vmul.f32 %v866, %v868
    %v870 = vadd.f32 %v866, %v869
    %vm871 = vweird.f32 %v774
    %vm872 = vweird.f32 %v866
    %vm873 = vmor %vm871, %vm872
    %v874 = vsel %vm873, %v866, %v870
    %v875 = vand.u32 2147483647, %v774
    %vm876 = vcmp.eq.f32.partialorder %v875, 8.507059e+37
    %v877 = vand.u32 %v774, 2147483648
    %v878 = vor.u32 1.1754944e-38, %v877
    %v879 = vsel %vm876, %v878, %v874
    %v880 = vmul.f32 1.0, %v879
    %v881 = vrcp.pop %v775
    %v882 = vmul.f32 %v775, %v881
    %v883 = vsub.f32 1.0, %v882
    %v884 = vmul.f32 %v881, %v883
    %v885 = vadd.f32 %v881, %v884
    %vm886 = vweird.f32 %v775
    %vm887 = vweird.f32 %v881
    %vm888 = vmor %vm886, %vm887
    %v889 = vsel %vm888, %v881, %v885
    %v890 = vand.u32 2147483647, %v775
    %vm891 = vcmp.eq.f32.partialorder %v890, 8.507059e+37
    %v892 = vand.u32 %v775, 2147483648
    %v893 = vor.u32 1.1754944e-38, %v892
    %v894 = vsel %vm891, %v893, %v889
    %v895 = vmul.f32 1.0, %v894
    %vm896 = vcmask 31744
    %897 = vst.msk [vmem:[%s9] sm:$0xff] %vm896, %v790
    %898 = vst.msk [vmem:[%s9 + $0x8] sm:$0xff] %vm896, %v805
    %899 = vst.msk [vmem:[%s9 + $0x10] sm:$0xff] %vm896, %v820
    %900 = vst.msk [vmem:[%s9 + $0x18] sm:$0xff] %vm896, %v835
    %901 = vst.msk [vmem:[%s9 + $0x20] sm:$0xff] %vm896, %v850
    %902 = vst.msk [vmem:[%s9 + $0x28] sm:$0xff] %vm896, %v865
    %903 = vst.msk [vmem:[%s9 + $0x30] sm:$0xff] %vm896, %v880
    %904 = vst.msk [vmem:[%s9 + $0x38] sm:$0xff] %vm896, %v895
    // Predicated region
    $region42: #{tpu_custom_call.1} parent=1 // pred_check
      _
    $region43: #{tpu_custom_call.1} parent=1 // pred_check_branch
      %906 = sbr.rel (0) target = $region45
    $region44: #{tpu_custom_call.1} parent=1 // pred_region
      _
    $region45: #{tpu_custom_call.1} parent=1 // pred_fallthru
      _
    // Predicated region
    $region46: #{tpu_custom_call.1} parent=1 // pred_check
      _
    $region47: #{tpu_custom_call.1} parent=1 // pred_check_branch
      %908 = sbr.rel (0) target = $region49
    $region48: #{tpu_custom_call.1} parent=1 // pred_region
      _
    $region49: #{tpu_custom_call.1} parent=1 // pred_fallthru
      _
    %909 = vsyncpa [#allocation4], 1

</llo_original>
